<compile_context>
chip_gen: v6e
topology: v6e:2x2x1
jax: 0.10.0
libtpu: 0.0.40
codegen_flags: <defaults>
</compile_context>

<pallas_src>
from functools import partial

import jax
import jax.numpy as jnp
from jax.experimental import pallas as pl
from jax.experimental.pallas import tpu as pltpu


def _compactcnn_kernel(x_ref, wc_ref, gamma_ref, beta_ref, wfc_ref, bfc_ref,
                       out_ref, *, valid_len):
    B, S_pad = x_ref.shape            # x is lane-padded: S_pad % 128 == 0
    C, K = wc_ref.shape
    L = valid_len                     # number of valid conv outputs (S - K + 1)

    x = x_ref[...]                    # (B, S_pad) f32, read once
    w = wc_ref[...]                   # (C, K)     f32, read once

    # ---- Conv2d(1, C, (1, K)) as K rotated FMA taps (in-kernel im2col). ----
    # conv[b, c, t] = sum_k x[b, t+k] * w[c, k] for t < L.  Each tap is an XLU
    # lane rotation (free slot) instead of an unaligned lane slice; lanes with
    # t >= L pick up wrapped / zero-padded values and are masked out below.
    # Conv bias omitted: it cancels exactly in the training-mode Batchlayer.
    conv = jnp.zeros((B, C, S_pad), jnp.float32)
    for k in range(K):                                    # K small & static: unrolled
        # x_k[:, t] == x[:, t + k] for all t < L (jnp.roll convention).
        x_k = x if k == 0 else pltpu.roll(x, shift=S_pad - k, axis=1)
        w_k = w[:, k:k + 1]                               # (C, 1) tap-k weights
        conv = conv + x_k[:, None, :] * w_k[None, :, :]   # (B, C, S_pad)

    # Lane-validity mask for the padded time axis.
    t_idx = jax.lax.broadcasted_iota(jnp.int32, (1, 1, S_pad), 2)
    valid = t_idx < L

    # ---- Batchlayer (training mode): stats over batch + valid time lanes. ----
    inv_n = 1.0 / float(B * L)
    conv_v = jnp.where(valid, conv, 0.0)
    mean = jnp.sum(jnp.sum(conv_v, axis=2, keepdims=True),
                   axis=0, keepdims=True) * inv_n                     # (1, C, 1)
    cent = jnp.where(valid, conv - mean, 0.0)                         # two-pass var
    var = jnp.sum(jnp.sum(cent * cent, axis=2, keepdims=True),
                  axis=0, keepdims=True) * inv_n                      # (1, C, 1)
    inv_std = jax.lax.rsqrt(var + 1e-5)        # single EUP op, full f32 accuracy
    scale = gamma_ref[...][None] * inv_std                            # (1, C, 1)
    shift = beta_ref[...][None] - mean * scale                        # (1, C, 1)

    # ---- folded BN + ReLU (one FMA + max), masked to valid lanes. ----
    act = jnp.where(valid, jnp.maximum(conv * scale + shift, 0.0), 0.0)

    # ---- global average pool over time (lane reduction). ----
    gap = jnp.sum(act, axis=2, keepdims=True) * (1.0 / float(L))      # (B, C, 1)

    # ---- Linear(C, classes) as a VPU/XLU contraction over C (too small for MXU).
    logits = jnp.sum(gap * wfc_ref[...][None, :, :], axis=1) + bfc_ref[...]
    out_ref[...] = logits                                             # (B, classes)


@partial(jax.jit, static_argnames="kernel_length")
def compactcnn_forward(x, params, kernel_length):
    """x: (B, 1, 1, S) float32, NCHW like the PyTorch module."""
    B, _, _, S = x.shape
    K = kernel_length
    C = params["conv_w"].shape[0]
    classes = params["fc_w"].shape[0]
    L = S - K + 1
    S_pad = ((S + 127) // 128) * 128          # lane-pad time axis to 128 multiple

    # Host-side glue: cheap XLA reshapes/transposes of traced params outside the
    # kernel (not constant-folded, just negligible), no im2col / patch gather.
    x2d = jnp.pad(x.reshape(B, S).astype(jnp.float32), ((0, 0), (0, S_pad - S)))
    wc = params["conv_w"].reshape(C, K).astype(jnp.float32)      # (C, K) compact
    gamma = params["gamma"].reshape(C, 1).astype(jnp.float32)
    beta = params["beta"].reshape(C, 1).astype(jnp.float32)
    wfc = params["fc_w"].T.astype(jnp.float32)                   # (C, classes)
    bfc = params["fc_b"].reshape(1, classes).astype(jnp.float32)
    # conv bias intentionally NOT passed: training-mode mean subtraction cancels
    # a per-channel constant exactly (reinstate if eval-mode stats are added).

    vmem = pl.BlockSpec(memory_space=pltpu.MemorySpace.VMEM)
    return pl.pallas_call(
        partial(_compactcnn_kernel, valid_len=L),
        out_shape=jax.ShapeDtypeStruct((B, classes), jnp.float32),
        in_specs=[vmem] * 6,
        out_specs=vmem,
    )(x2d, wc, gamma, beta, wfc, bfc)


def compactcnn_reference(x, params, kernel_length):
    """Pure-JAX mirror of the PyTorch forward (conv bias included, real divide)."""
    B, _, _, S = x.shape
    K = kernel_length
    C = params["conv_w"].shape[0]
    L = S - K + 1
    x1d = x.reshape(B, S).astype(jnp.float32)
    w = params["conv_w"].reshape(C, K).astype(jnp.float32)
    idx = jnp.arange(L)[:, None] + jnp.arange(K)[None, :]
    patches = x1d[:, idx]                                            # (B, L, K)
    conv = jnp.einsum("blk,ck->bcl", patches, w) \
        + params["conv_b"].reshape(1, C, 1).astype(jnp.float32)      # (B, C, L)
    mean = jnp.mean(conv, axis=(0, 2), keepdims=True)
    std = jnp.sqrt(jnp.mean((conv - mean) ** 2, axis=(0, 2), keepdims=True) + 1e-5)
    bn = (conv - mean) / std * params["gamma"].reshape(1, C, 1) \
        + params["beta"].reshape(1, C, 1)
    act = jnp.maximum(bn, 0.0)
    gap = jnp.mean(act, axis=2)                                      # (B, C)
    return gap @ params["fc_w"].T.astype(jnp.float32) + params["fc_b"].reshape(1, -1)


def init_params(key, classes=2, channels=32, kernel_length=16):
    ks = jax.random.split(key, 6)
    # Conv2d(1, channels, (1, K)): weight (C, 1, 1, K), bias (C,)
    fan_in_conv = 1 * 1 * kernel_length
    bc_bound = 1.0 / jnp.sqrt(fan_in_conv)
    conv_w = jax.random.uniform(ks[0], (channels, 1, 1, kernel_length),
                                minval=-bc_bound, maxval=bc_bound)
    conv_b = jax.random.uniform(ks[1], (channels,), minval=-bc_bound, maxval=bc_bound)
    # Batchlayer gamma/beta ~ U(-0.1, 0.1), shape (1, C, 1, 1)
    gamma = jax.random.uniform(ks[2], (1, channels, 1, 1), minval=-0.1, maxval=0.1)
    beta = jax.random.uniform(ks[3], (1, channels, 1, 1), minval=-0.1, maxval=0.1)
    # Linear(channels, classes): weight (classes, C), bias (classes,)
    fc_bound = 1.0 / jnp.sqrt(channels)
    fc_w = jax.random.uniform(ks[4], (classes, channels), minval=-fc_bound, maxval=fc_bound)
    fc_b = jax.random.uniform(ks[5], (classes,), minval=-fc_bound, maxval=fc_bound)
    return dict(conv_w=conv_w, conv_b=conv_b, gamma=gamma, beta=beta,
                fc_w=fc_w, fc_b=fc_b)


if __name__ == "__main__":
    # Small shapes consistent with the module: B=2, 1 input channel, H=1, S=64,
    # 32 conv channels, kernel length 16, 2 classes.
    B, S, K, C, CLASSES = 2, 64, 16, 32, 2
    key = jax.random.PRNGKey(0)
    k_x, k_p = jax.random.split(key)
    x = jax.random.normal(k_x, (B, 1, 1, S), dtype=jnp.float32)
    params = init_params(k_p, classes=CLASSES, channels=C, kernel_length=K)

    out = compactcnn_forward(x, params, kernel_length=K)
    out = jax.block_until_ready(out)
    assert out.shape == (B, CLASSES)

    # Self-check against the pure-JAX reference (rsqrt is full precision, so the
    # tolerance is tight; differences are only f32 accumulation order).
    ref = compactcnn_reference(x, params, kernel_length=K)
    assert jnp.allclose(out, ref, rtol=1e-3, atol=1e-5), (out, ref)

    print("KERNEL_OK")
</pallas_src>

<mosaic_0001>
module attributes {stable_mosaic.version = 11 : i64} {
  func.func @_compactcnn_kernel(%arg0: memref<2x128xf32, #tpu.memory_space<vmem>>, %arg1: memref<32x16xf32, #tpu.memory_space<vmem>>, %arg2: memref<32x1xf32, #tpu.memory_space<vmem>>, %arg3: memref<32x1xf32, #tpu.memory_space<vmem>>, %arg4: memref<32x2xf32, #tpu.memory_space<vmem>>, %arg5: memref<1x2xf32, #tpu.memory_space<vmem>>, %arg6: memref<2x2xf32, #tpu.memory_space<vmem>>) attributes {dimension_semantics = [], scalar_prefetch = 0 : i64, scratch_operands = 0 : i64, tpu.core_type = #tpu.core_type<tc>} {
    %c0 = arith.constant 0 : index
    %c0_0 = arith.constant 0 : index
    %0 = vector.load %arg0[%c0, %c0_0] : memref<2x128xf32, #tpu.memory_space<vmem>>, vector<2x128xf32>
    %c0_1 = arith.constant 0 : index
    %c0_2 = arith.constant 0 : index
    %1 = vector.load %arg1[%c0_1, %c0_2] : memref<32x16xf32, #tpu.memory_space<vmem>>, vector<32x16xf32>
    %cst = arith.constant 0.000000e+00 : f32
    %2 = vector.broadcast %cst : f32 to vector<2x32x128xf32>
    %3 = vector.extract_strided_slice %1 {offsets = [0, 0], sizes = [32, 1], strides = [1, 1]} : vector<32x16xf32> to vector<32x1xf32>
    %4 = vector.shape_cast %0 : vector<2x128xf32> to vector<2x1x128xf32>
    %5 = vector.shape_cast %3 : vector<32x1xf32> to vector<1x32x1xf32>
    %6 = vector.broadcast %4 : vector<2x1x128xf32> to vector<2x32x128xf32>
    %7 = vector.broadcast %5 : vector<1x32x1xf32> to vector<2x32x128xf32>
    %8 = arith.mulf %6, %7 : vector<2x32x128xf32>
    %9 = arith.addf %2, %8 : vector<2x32x128xf32>
    %c127_i32 = arith.constant 127 : i32
    %10 = tpu.dynamic_rotate %0 by %c127_i32 dim 1 : vector<2x128xf32>, i32 -> vector<2x128xf32>
    %11 = vector.extract_strided_slice %1 {offsets = [0, 1], sizes = [32, 1], strides = [1, 1]} : vector<32x16xf32> to vector<32x1xf32>
    %12 = vector.shape_cast %10 : vector<2x128xf32> to vector<2x1x128xf32>
    %13 = vector.shape_cast %11 : vector<32x1xf32> to vector<1x32x1xf32>
    %14 = vector.broadcast %12 : vector<2x1x128xf32> to vector<2x32x128xf32>
    %15 = vector.broadcast %13 : vector<1x32x1xf32> to vector<2x32x128xf32>
    %16 = arith.mulf %14, %15 : vector<2x32x128xf32>
    %17 = arith.addf %9, %16 : vector<2x32x128xf32>
    %c126_i32 = arith.constant 126 : i32
    %18 = tpu.dynamic_rotate %0 by %c126_i32 dim 1 : vector<2x128xf32>, i32 -> vector<2x128xf32>
    %19 = vector.extract_strided_slice %1 {offsets = [0, 2], sizes = [32, 1], strides = [1, 1]} : vector<32x16xf32> to vector<32x1xf32>
    %20 = vector.shape_cast %18 : vector<2x128xf32> to vector<2x1x128xf32>
    %21 = vector.shape_cast %19 : vector<32x1xf32> to vector<1x32x1xf32>
    %22 = vector.broadcast %20 : vector<2x1x128xf32> to vector<2x32x128xf32>
    %23 = vector.broadcast %21 : vector<1x32x1xf32> to vector<2x32x128xf32>
    %24 = arith.mulf %22, %23 : vector<2x32x128xf32>
    %25 = arith.addf %17, %24 : vector<2x32x128xf32>
    %c125_i32 = arith.constant 125 : i32
    %26 = tpu.dynamic_rotate %0 by %c125_i32 dim 1 : vector<2x128xf32>, i32 -> vector<2x128xf32>
    %27 = vector.extract_strided_slice %1 {offsets = [0, 3], sizes = [32, 1], strides = [1, 1]} : vector<32x16xf32> to vector<32x1xf32>
    %28 = vector.shape_cast %26 : vector<2x128xf32> to vector<2x1x128xf32>
    %29 = vector.shape_cast %27 : vector<32x1xf32> to vector<1x32x1xf32>
    %30 = vector.broadcast %28 : vector<2x1x128xf32> to vector<2x32x128xf32>
    %31 = vector.broadcast %29 : vector<1x32x1xf32> to vector<2x32x128xf32>
    %32 = arith.mulf %30, %31 : vector<2x32x128xf32>
    %33 = arith.addf %25, %32 : vector<2x32x128xf32>
    %c124_i32 = arith.constant 124 : i32
    %34 = tpu.dynamic_rotate %0 by %c124_i32 dim 1 : vector<2x128xf32>, i32 -> vector<2x128xf32>
    %35 = vector.extract_strided_slice %1 {offsets = [0, 4], sizes = [32, 1], strides = [1, 1]} : vector<32x16xf32> to vector<32x1xf32>
    %36 = vector.shape_cast %34 : vector<2x128xf32> to vector<2x1x128xf32>
    %37 = vector.shape_cast %35 : vector<32x1xf32> to vector<1x32x1xf32>
    %38 = vector.broadcast %36 : vector<2x1x128xf32> to vector<2x32x128xf32>
    %39 = vector.broadcast %37 : vector<1x32x1xf32> to vector<2x32x128xf32>
    %40 = arith.mulf %38, %39 : vector<2x32x128xf32>
    %41 = arith.addf %33, %40 : vector<2x32x128xf32>
    %c123_i32 = arith.constant 123 : i32
    %42 = tpu.dynamic_rotate %0 by %c123_i32 dim 1 : vector<2x128xf32>, i32 -> vector<2x128xf32>
    %43 = vector.extract_strided_slice %1 {offsets = [0, 5], sizes = [32, 1], strides = [1, 1]} : vector<32x16xf32> to vector<32x1xf32>
    %44 = vector.shape_cast %42 : vector<2x128xf32> to vector<2x1x128xf32>
    %45 = vector.shape_cast %43 : vector<32x1xf32> to vector<1x32x1xf32>
    %46 = vector.broadcast %44 : vector<2x1x128xf32> to vector<2x32x128xf32>
    %47 = vector.broadcast %45 : vector<1x32x1xf32> to vector<2x32x128xf32>
    %48 = arith.mulf %46, %47 : vector<2x32x128xf32>
    %49 = arith.addf %41, %48 : vector<2x32x128xf32>
    %c122_i32 = arith.constant 122 : i32
    %50 = tpu.dynamic_rotate %0 by %c122_i32 dim 1 : vector<2x128xf32>, i32 -> vector<2x128xf32>
    %51 = vector.extract_strided_slice %1 {offsets = [0, 6], sizes = [32, 1], strides = [1, 1]} : vector<32x16xf32> to vector<32x1xf32>
    %52 = vector.shape_cast %50 : vector<2x128xf32> to vector<2x1x128xf32>
    %53 = vector.shape_cast %51 : vector<32x1xf32> to vector<1x32x1xf32>
    %54 = vector.broadcast %52 : vector<2x1x128xf32> to vector<2x32x128xf32>
    %55 = vector.broadcast %53 : vector<1x32x1xf32> to vector<2x32x128xf32>
    %56 = arith.mulf %54, %55 : vector<2x32x128xf32>
    %57 = arith.addf %49, %56 : vector<2x32x128xf32>
    %c121_i32 = arith.constant 121 : i32
    %58 = tpu.dynamic_rotate %0 by %c121_i32 dim 1 : vector<2x128xf32>, i32 -> vector<2x128xf32>
    %59 = vector.extract_strided_slice %1 {offsets = [0, 7], sizes = [32, 1], strides = [1, 1]} : vector<32x16xf32> to vector<32x1xf32>
    %60 = vector.shape_cast %58 : vector<2x128xf32> to vector<2x1x128xf32>
    %61 = vector.shape_cast %59 : vector<32x1xf32> to vector<1x32x1xf32>
    %62 = vector.broadcast %60 : vector<2x1x128xf32> to vector<2x32x128xf32>
    %63 = vector.broadcast %61 : vector<1x32x1xf32> to vector<2x32x128xf32>
    %64 = arith.mulf %62, %63 : vector<2x32x128xf32>
    %65 = arith.addf %57, %64 : vector<2x32x128xf32>
    %c120_i32 = arith.constant 120 : i32
    %66 = tpu.dynamic_rotate %0 by %c120_i32 dim 1 : vector<2x128xf32>, i32 -> vector<2x128xf32>
    %67 = vector.extract_strided_slice %1 {offsets = [0, 8], sizes = [32, 1], strides = [1, 1]} : vector<32x16xf32> to vector<32x1xf32>
    %68 = vector.shape_cast %66 : vector<2x128xf32> to vector<2x1x128xf32>
    %69 = vector.shape_cast %67 : vector<32x1xf32> to vector<1x32x1xf32>
    %70 = vector.broadcast %68 : vector<2x1x128xf32> to vector<2x32x128xf32>
    %71 = vector.broadcast %69 : vector<1x32x1xf32> to vector<2x32x128xf32>
    %72 = arith.mulf %70, %71 : vector<2x32x128xf32>
    %73 = arith.addf %65, %72 : vector<2x32x128xf32>
    %c119_i32 = arith.constant 119 : i32
    %74 = tpu.dynamic_rotate %0 by %c119_i32 dim 1 : vector<2x128xf32>, i32 -> vector<2x128xf32>
    %75 = vector.extract_strided_slice %1 {offsets = [0, 9], sizes = [32, 1], strides = [1, 1]} : vector<32x16xf32> to vector<32x1xf32>
    %76 = vector.shape_cast %74 : vector<2x128xf32> to vector<2x1x128xf32>
    %77 = vector.shape_cast %75 : vector<32x1xf32> to vector<1x32x1xf32>
    %78 = vector.broadcast %76 : vector<2x1x128xf32> to vector<2x32x128xf32>
    %79 = vector.broadcast %77 : vector<1x32x1xf32> to vector<2x32x128xf32>
    %80 = arith.mulf %78, %79 : vector<2x32x128xf32>
    %81 = arith.addf %73, %80 : vector<2x32x128xf32>
    %c118_i32 = arith.constant 118 : i32
    %82 = tpu.dynamic_rotate %0 by %c118_i32 dim 1 : vector<2x128xf32>, i32 -> vector<2x128xf32>
    %83 = vector.extract_strided_slice %1 {offsets = [0, 10], sizes = [32, 1], strides = [1, 1]} : vector<32x16xf32> to vector<32x1xf32>
    %84 = vector.shape_cast %82 : vector<2x128xf32> to vector<2x1x128xf32>
    %85 = vector.shape_cast %83 : vector<32x1xf32> to vector<1x32x1xf32>
    %86 = vector.broadcast %84 : vector<2x1x128xf32> to vector<2x32x128xf32>
    %87 = vector.broadcast %85 : vector<1x32x1xf32> to vector<2x32x128xf32>
    %88 = arith.mulf %86, %87 : vector<2x32x128xf32>
    %89 = arith.addf %81, %88 : vector<2x32x128xf32>
    %c117_i32 = arith.constant 117 : i32
    %90 = tpu.dynamic_rotate %0 by %c117_i32 dim 1 : vector<2x128xf32>, i32 -> vector<2x128xf32>
    %91 = vector.extract_strided_slice %1 {offsets = [0, 11], sizes = [32, 1], strides = [1, 1]} : vector<32x16xf32> to vector<32x1xf32>
    %92 = vector.shape_cast %90 : vector<2x128xf32> to vector<2x1x128xf32>
    %93 = vector.shape_cast %91 : vector<32x1xf32> to vector<1x32x1xf32>
    %94 = vector.broadcast %92 : vector<2x1x128xf32> to vector<2x32x128xf32>
    %95 = vector.broadcast %93 : vector<1x32x1xf32> to vector<2x32x128xf32>
    %96 = arith.mulf %94, %95 : vector<2x32x128xf32>
    %97 = arith.addf %89, %96 : vector<2x32x128xf32>
    %c116_i32 = arith.constant 116 : i32
    %98 = tpu.dynamic_rotate %0 by %c116_i32 dim 1 : vector<2x128xf32>, i32 -> vector<2x128xf32>
    %99 = vector.extract_strided_slice %1 {offsets = [0, 12], sizes = [32, 1], strides = [1, 1]} : vector<32x16xf32> to vector<32x1xf32>
    %100 = vector.shape_cast %98 : vector<2x128xf32> to vector<2x1x128xf32>
    %101 = vector.shape_cast %99 : vector<32x1xf32> to vector<1x32x1xf32>
    %102 = vector.broadcast %100 : vector<2x1x128xf32> to vector<2x32x128xf32>
    %103 = vector.broadcast %101 : vector<1x32x1xf32> to vector<2x32x128xf32>
    %104 = arith.mulf %102, %103 : vector<2x32x128xf32>
    %105 = arith.addf %97, %104 : vector<2x32x128xf32>
    %c115_i32 = arith.constant 115 : i32
    %106 = tpu.dynamic_rotate %0 by %c115_i32 dim 1 : vector<2x128xf32>, i32 -> vector<2x128xf32>
    %107 = vector.extract_strided_slice %1 {offsets = [0, 13], sizes = [32, 1], strides = [1, 1]} : vector<32x16xf32> to vector<32x1xf32>
    %108 = vector.shape_cast %106 : vector<2x128xf32> to vector<2x1x128xf32>
    %109 = vector.shape_cast %107 : vector<32x1xf32> to vector<1x32x1xf32>
    %110 = vector.broadcast %108 : vector<2x1x128xf32> to vector<2x32x128xf32>
    %111 = vector.broadcast %109 : vector<1x32x1xf32> to vector<2x32x128xf32>
    %112 = arith.mulf %110, %111 : vector<2x32x128xf32>
    %113 = arith.addf %105, %112 : vector<2x32x128xf32>
    %c114_i32 = arith.constant 114 : i32
    %114 = tpu.dynamic_rotate %0 by %c114_i32 dim 1 : vector<2x128xf32>, i32 -> vector<2x128xf32>
    %115 = vector.extract_strided_slice %1 {offsets = [0, 14], sizes = [32, 1], strides = [1, 1]} : vector<32x16xf32> to vector<32x1xf32>
    %116 = vector.shape_cast %114 : vector<2x128xf32> to vector<2x1x128xf32>
    %117 = vector.shape_cast %115 : vector<32x1xf32> to vector<1x32x1xf32>
    %118 = vector.broadcast %116 : vector<2x1x128xf32> to vector<2x32x128xf32>
    %119 = vector.broadcast %117 : vector<1x32x1xf32> to vector<2x32x128xf32>
    %120 = arith.mulf %118, %119 : vector<2x32x128xf32>
    %121 = arith.addf %113, %120 : vector<2x32x128xf32>
    %c113_i32 = arith.constant 113 : i32
    %122 = tpu.dynamic_rotate %0 by %c113_i32 dim 1 : vector<2x128xf32>, i32 -> vector<2x128xf32>
    %123 = vector.extract_strided_slice %1 {offsets = [0, 15], sizes = [32, 1], strides = [1, 1]} : vector<32x16xf32> to vector<32x1xf32>
    %124 = vector.shape_cast %122 : vector<2x128xf32> to vector<2x1x128xf32>
    %125 = vector.shape_cast %123 : vector<32x1xf32> to vector<1x32x1xf32>
    %126 = vector.broadcast %124 : vector<2x1x128xf32> to vector<2x32x128xf32>
    %127 = vector.broadcast %125 : vector<1x32x1xf32> to vector<2x32x128xf32>
    %128 = arith.mulf %126, %127 : vector<2x32x128xf32>
    %129 = arith.addf %121, %128 : vector<2x32x128xf32>
    %130 = tpu.iota {dimensions = array<i32: 2>} : vector<1x1x128xi32>
    %c49_i32 = arith.constant 49 : i32
    %131 = vector.broadcast %c49_i32 : i32 to vector<1x1x128xi32>
    %132 = arith.cmpi slt, %130, %131 : vector<1x1x128xi32>
    %cst_3 = arith.constant 0.000000e+00 : f32
    %133 = vector.shape_cast %132 : vector<1x1x128xi1> to vector<1x1x128xi1>
    %134 = vector.broadcast %133 : vector<1x1x128xi1> to vector<2x32x128xi1>
    %135 = vector.broadcast %cst_3 : f32 to vector<2x32x128xf32>
    %136 = arith.select %134, %129, %135 : vector<2x32x128xi1>, vector<2x32x128xf32>
    %cst_4 = arith.constant dense<0.000000e+00> : vector<2x32xf32>
    %137 = vector.multi_reduction <add>, %136, %cst_4 [2] : vector<2x32x128xf32> to vector<2x32xf32>
    %138 = vector.shape_cast %137 : vector<2x32xf32> to vector<2x32x1xf32>
    %cst_5 = arith.constant dense<0.000000e+00> : vector<32x1xf32>
    %139 = vector.multi_reduction <add>, %138, %cst_5 [0] : vector<2x32x1xf32> to vector<32x1xf32>
    %140 = vector.shape_cast %139 : vector<32x1xf32> to vector<1x32x1xf32>
    %cst_6 = arith.constant 0.0102040814 : f32
    %141 = vector.broadcast %cst_6 : f32 to vector<1x32x1xf32>
    %142 = arith.mulf %140, %141 : vector<1x32x1xf32>
    %143 = vector.broadcast %142 : vector<1x32x1xf32> to vector<2x32x128xf32>
    %144 = arith.subf %129, %143 : vector<2x32x128xf32>
    %cst_7 = arith.constant 0.000000e+00 : f32
    %145 = vector.shape_cast %132 : vector<1x1x128xi1> to vector<1x1x128xi1>
    %146 = vector.broadcast %145 : vector<1x1x128xi1> to vector<2x32x128xi1>
    %147 = vector.broadcast %cst_7 : f32 to vector<2x32x128xf32>
    %148 = arith.select %146, %144, %147 : vector<2x32x128xi1>, vector<2x32x128xf32>
    %149 = arith.mulf %148, %148 : vector<2x32x128xf32>
    %cst_8 = arith.constant dense<0.000000e+00> : vector<2x32xf32>
    %150 = vector.multi_reduction <add>, %149, %cst_8 [2] : vector<2x32x128xf32> to vector<2x32xf32>
    %151 = vector.shape_cast %150 : vector<2x32xf32> to vector<2x32x1xf32>
    %cst_9 = arith.constant dense<0.000000e+00> : vector<32x1xf32>
    %152 = vector.multi_reduction <add>, %151, %cst_9 [0] : vector<2x32x1xf32> to vector<32x1xf32>
    %153 = vector.shape_cast %152 : vector<32x1xf32> to vector<1x32x1xf32>
    %cst_10 = arith.constant 0.0102040814 : f32
    %154 = vector.broadcast %cst_10 : f32 to vector<1x32x1xf32>
    %155 = arith.mulf %153, %154 : vector<1x32x1xf32>
    %cst_11 = arith.constant 9.99999974E-6 : f32
    %156 = vector.broadcast %cst_11 : f32 to vector<1x32x1xf32>
    %157 = arith.addf %155, %156 : vector<1x32x1xf32>
    %158 = math.rsqrt %157 : vector<1x32x1xf32>
    %c0_12 = arith.constant 0 : index
    %c0_13 = arith.constant 0 : index
    %159 = vector.load %arg2[%c0_12, %c0_13] : memref<32x1xf32, #tpu.memory_space<vmem>>, vector<32x1xf32>
    %160 = vector.shape_cast %159 : vector<32x1xf32> to vector<1x32x1xf32>
    %161 = arith.mulf %160, %158 : vector<1x32x1xf32>
    %c0_14 = arith.constant 0 : index
    %c0_15 = arith.constant 0 : index
    %162 = vector.load %arg3[%c0_14, %c0_15] : memref<32x1xf32, #tpu.memory_space<vmem>>, vector<32x1xf32>
    %163 = vector.shape_cast %162 : vector<32x1xf32> to vector<1x32x1xf32>
    %164 = arith.mulf %142, %161 : vector<1x32x1xf32>
    %165 = arith.subf %163, %164 : vector<1x32x1xf32>
    %166 = vector.broadcast %161 : vector<1x32x1xf32> to vector<2x32x128xf32>
    %167 = arith.mulf %129, %166 : vector<2x32x128xf32>
    %168 = vector.broadcast %165 : vector<1x32x1xf32> to vector<2x32x128xf32>
    %169 = arith.addf %167, %168 : vector<2x32x128xf32>
    %cst_16 = arith.constant 0.000000e+00 : f32
    %170 = vector.broadcast %cst_16 : f32 to vector<2x32x128xf32>
    %171 = arith.maximumf %169, %170 : vector<2x32x128xf32>
    %cst_17 = arith.constant 0.000000e+00 : f32
    %172 = vector.shape_cast %132 : vector<1x1x128xi1> to vector<1x1x128xi1>
    %173 = vector.broadcast %172 : vector<1x1x128xi1> to vector<2x32x128xi1>
    %174 = vector.broadcast %cst_17 : f32 to vector<2x32x128xf32>
    %175 = arith.select %173, %171, %174 : vector<2x32x128xi1>, vector<2x32x128xf32>
    %cst_18 = arith.constant dense<0.000000e+00> : vector<2x32xf32>
    %176 = vector.multi_reduction <add>, %175, %cst_18 [2] : vector<2x32x128xf32> to vector<2x32xf32>
    %177 = vector.shape_cast %176 : vector<2x32xf32> to vector<2x32x1xf32>
    %cst_19 = arith.constant 0.0204081628 : f32
    %178 = vector.broadcast %cst_19 : f32 to vector<2x32x1xf32>
    %179 = arith.mulf %177, %178 : vector<2x32x1xf32>
    %c0_20 = arith.constant 0 : index
    %c0_21 = arith.constant 0 : index
    %180 = vector.load %arg4[%c0_20, %c0_21] : memref<32x2xf32, #tpu.memory_space<vmem>>, vector<32x2xf32>
    %181 = vector.shape_cast %180 : vector<32x2xf32> to vector<1x32x2xf32>
    %182 = vector.broadcast %179 : vector<2x32x1xf32> to vector<2x32x2xf32>
    %183 = vector.broadcast %181 : vector<1x32x2xf32> to vector<2x32x2xf32>
    %184 = arith.mulf %182, %183 : vector<2x32x2xf32>
    %cst_22 = arith.constant dense<0.000000e+00> : vector<2x2xf32>
    %185 = vector.multi_reduction <add>, %184, %cst_22 [1] : vector<2x32x2xf32> to vector<2x2xf32>
    %c0_23 = arith.constant 0 : index
    %c0_24 = arith.constant 0 : index
    %186 = vector.load %arg5[%c0_23, %c0_24] : memref<1x2xf32, #tpu.memory_space<vmem>>, vector<1x2xf32>
    %187 = vector.broadcast %186 : vector<1x2xf32> to vector<2x2xf32>
    %188 = arith.addf %185, %187 : vector<2x2xf32>
    %c0_25 = arith.constant 0 : index
    %c0_26 = arith.constant 0 : index
    %189 = vector.load %arg6[%c0_25, %c0_26] : memref<2x2xf32, #tpu.memory_space<vmem>>, vector<2x2xf32>
    tpu.vector_store %arg6[%c0_25, %c0_26], %188 {strides = array<i32>} : memref<2x2xf32, #tpu.memory_space<vmem>>, vector<2x2xf32>,
    return
  }
}

</mosaic_0001>

<llo_original>
// kernel: compactcnn_forward.1
$region0: #{compactcnn_forward.1}
  #allocation0 [shape = 'u32[]', space=smem, size = 0x4, offset = 0x4, fixed_abs, tag = 'smem constant byte address 0x4 - core index']
  #allocation1 [shape = 'u32[144,128]{1,0:T(1,128)}', space=vmem, size = 0x12000, scoped, tag = 'internal scratch']
  %s0 = inlined_call_operand.vmem [shape: f32[2,128], index: 0, kind: input, shape index: {}]
  %s1 = inlined_call_operand.vmem [shape: f32[32,16], index: 1, kind: input, shape index: {}]
  %s2 = inlined_call_operand.vmem [shape: f32[32,1], index: 2, kind: input, shape index: {}]
  %s3 = inlined_call_operand.vmem [shape: f32[32,1], index: 3, kind: input, shape index: {}]
  %s4 = inlined_call_operand.vmem [shape: f32[32,2], index: 4, kind: input, shape index: {}]
  %s5 = inlined_call_operand.vmem [shape: f32[1,2], index: 5, kind: input, shape index: {}]
  %s6 = inlined_call_operand.hbm [shape: f32[2,2], index: 6, kind: output, shape index: {}]
  %s7 = sld [smem:[#allocation0]]
  $region34: #{compactcnn_forward.1} parent=0
    _
  %s9 = ssub.s32 1, %s7
  %s10 = scalar_select 0, %s9, %s7
  $region1: #{compactcnn_forward.1} parent=0
    #allocation2 [shape = 'u8[1024]{0}', space=vmem, size = 0x400, scoped, tag = 'output window, operand 0, single buffered']
    #allocation3 [shape = 's32[1]{0}', space=sflag, size = 0x4, scoped, tag = 'scoped memory for compactcnn_forward.1']
    %11 = vsyncpa [#allocation3], 0
    // Predicated region
    $region2: #{compactcnn_forward.1} parent=1 // pred_check
      _
    $region3: #{compactcnn_forward.1} parent=1 // pred_check_branch
      %13 = sbr.rel (0) target = $region5
    $region4: #{compactcnn_forward.1} parent=1 // pred_region
      _
    $region5: #{compactcnn_forward.1} parent=1 // pred_fallthru
      _
    // Predicated region
    $region6: #{compactcnn_forward.1} parent=1 // pred_check
      _
    $region7: #{compactcnn_forward.1} parent=1 // pred_check_branch
      %15 = sbr.rel (0) target = $region9
    $region8: #{compactcnn_forward.1} parent=1 // pred_region
      _
    $region9: #{compactcnn_forward.1} parent=1 // pred_fallthru
      _
    // Predicated region
    $region10: #{compactcnn_forward.1} parent=1 // pred_check
      _
    $region11: #{compactcnn_forward.1} parent=1 // pred_check_branch
      %17 = sbr.rel (0) target = $region13
    $region12: #{compactcnn_forward.1} parent=1 // pred_region
      _
    $region13: #{compactcnn_forward.1} parent=1 // pred_fallthru
      _
    // Predicated region
    $region14: #{compactcnn_forward.1} parent=1 // pred_check
      _
    $region15: #{compactcnn_forward.1} parent=1 // pred_check_branch
      %19 = sbr.rel (0) target = $region17
    $region16: #{compactcnn_forward.1} parent=1 // pred_region
      _
    $region17: #{compactcnn_forward.1} parent=1 // pred_fallthru
      _
    // Predicated region
    $region18: #{compactcnn_forward.1} parent=1 // pred_check
      _
    $region19: #{compactcnn_forward.1} parent=1 // pred_check_branch
      %21 = sbr.rel (0) target = $region21
    $region20: #{compactcnn_forward.1} parent=1 // pred_region
      _
    $region21: #{compactcnn_forward.1} parent=1 // pred_fallthru
      _
    // Predicated region
    $region22: #{compactcnn_forward.1} parent=1 // pred_check
      _
    $region23: #{compactcnn_forward.1} parent=1 // pred_check_branch
      %23 = sbr.rel (0) target = $region25
    $region24: #{compactcnn_forward.1} parent=1 // pred_region
      _
    $region25: #{compactcnn_forward.1} parent=1 // pred_fallthru
      _
    %v24 = vld [vmem:[%s0] sm:$0x3]
    %v25 = vld [vmem:[%s1] sm:$0xff]
    %v26 = vld [vmem:[%s1 + $0x8] sm:$0xff]
    %v27 = vld [vmem:[%s1 + $0x10] sm:$0xff]
    %v28 = vld [vmem:[%s1 + $0x18] sm:$0xff]
    %v31 = vunpack.c.l.s4 1966171168
    %v32 = vunpack.c.0.s8 %v31
    %v33 = vlaneseq
    %v34 = vshrl.u32 %v33, 7
    %v35 = vsub.s32 %v32, %v34
    %v36 = vrot.slane %v24, %v35
    %v37 = vcombine.high %v36, %v36
    %v39 = vunpack.c.l.s4 1966171168
    %v40 = vunpack.c.0.s8 %v39
    %v41 = vlaneseq
    %v42 = vshrl.u32 %v41, 7
    %v43 = vsub.s32 %v40, %v42
    %v44 = vrot.slane %v36, %v43
    %v46 = vunpack.c.l.s4 1966171168
    %v47 = vunpack.c.0.s8 %v46
    %v48 = vlaneseq
    %v49 = vshrl.u32 %v48, 7
    %v50 = vsub.s32 %v47, %v49
    %v51 = vrot.slane %v37, %v50
    %v52 = vlaneseq
    %v53 = vshrl.u32 %v52, 7
    %v54 = vsub.s32 0, %v53
    %v55 = vrot.slane %v44, %v54
    %v56 = vlaneseq
    %v57 = vshrl.u32 %v56, 7
    %v58 = vsub.s32 0, %v57
    %v59 = vrot.slane %v51, %v58
    %63 = vset.pattern.permute.xlu0 0
    %64 = vperm.xlu0 %63, %v25
    %v65 = vpop.permute.xlu0 %64
    %68 = vset.pattern.permute.xlu0 0
    %69 = vperm.xlu0 %68, %v26
    %v70 = vpop.permute.xlu0 %69
    %73 = vset.pattern.permute.xlu0 0
    %74 = vperm.xlu0 %73, %v27
    %v75 = vpop.permute.xlu0 %74
    %78 = vset.pattern.permute.xlu0 0
    %79 = vperm.xlu0 %78, %v28
    %v80 = vpop.permute.xlu0 %79
    %v82 = vmul.f32 %v55, %v65
    %v83 = vmul.f32 %v55, %v70
    %v84 = vmul.f32 %v55, %v75
    %v85 = vmul.f32 %v55, %v80
    %v86 = vmul.f32 %v59, %v65
    %v87 = vmul.f32 %v59, %v70
    %v88 = vmul.f32 %v59, %v75
    %v89 = vmul.f32 %v59, %v80
    %v90 = vadd.f32 %v82, 0.0
    %v91 = vadd.f32 %v83, 0.0
    %v92 = vadd.f32 %v84, 0.0
    %v93 = vadd.f32 %v85, 0.0
    %v94 = vadd.f32 %v86, 0.0
    %v95 = vadd.f32 %v87, 0.0
    %v96 = vadd.f32 %v88, 0.0
    %v97 = vadd.f32 %v89, 0.0
    %98 = vrot.lane.b32.xlu0 %v24, 127
    %v99 = vpop.permute.xlu0 %98
    %v102 = vunpack.c.l.s4 1966171168
    %v103 = vunpack.c.0.s8 %v102
    %v104 = vlaneseq
    %v105 = vshrl.u32 %v104, 7
    %v106 = vsub.s32 %v103, %v105
    %v107 = vrot.slane %v99, %v106
    %v108 = vcombine.high %v107, %v107
    %v110 = vunpack.c.l.s4 1966171168
    %v111 = vunpack.c.0.s8 %v110
    %v112 = vlaneseq
    %v113 = vshrl.u32 %v112, 7
    %v114 = vsub.s32 %v111, %v113
    %v115 = vrot.slane %v107, %v114
    %v117 = vunpack.c.l.s4 1966171168
    %v118 = vunpack.c.0.s8 %v117
    %v119 = vlaneseq
    %v120 = vshrl.u32 %v119, 7
    %v121 = vsub.s32 %v118, %v120
    %v122 = vrot.slane %v108, %v121
    %v123 = vlaneseq
    %v124 = vshrl.u32 %v123, 7
    %v125 = vsub.s32 0, %v124
    %v126 = vrot.slane %v115, %v125
    %v127 = vlaneseq
    %v128 = vshrl.u32 %v127, 7
    %v129 = vsub.s32 0, %v128
    %v130 = vrot.slane %v122, %v129
    %133 = vset.pattern.permute.xlu0 1
    %134 = vperm.xlu0 %133, %v25
    %v135 = vpop.permute.xlu0 %134
    %137 = vset.pattern.permute.xlu0 1
    %138 = vperm.xlu0 %137, %v26
    %v139 = vpop.permute.xlu0 %138
    %141 = vset.pattern.permute.xlu0 1
    %142 = vperm.xlu0 %141, %v27
    %v143 = vpop.permute.xlu0 %142
    %145 = vset.pattern.permute.xlu0 1
    %146 = vperm.xlu0 %145, %v28
    %v147 = vpop.permute.xlu0 %146
    %v149 = vmul.f32 %v126, %v135
    %v150 = vmul.f32 %v126, %v139
    %v151 = vmul.f32 %v126, %v143
    %v152 = vmul.f32 %v126, %v147
    %v153 = vmul.f32 %v130, %v135
    %v154 = vmul.f32 %v130, %v139
    %v155 = vmul.f32 %v130, %v143
    %v156 = vmul.f32 %v130, %v147
    %v157 = vadd.f32 %v90, %v149
    %v158 = vadd.f32 %v91, %v150
    %v159 = vadd.f32 %v92, %v151
    %v160 = vadd.f32 %v93, %v152
    %v161 = vadd.f32 %v94, %v153
    %v162 = vadd.f32 %v95, %v154
    %v163 = vadd.f32 %v96, %v155
    %v164 = vadd.f32 %v97, %v156
    %165 = vrot.lane.b32.xlu0 %v24, 126
    %v166 = vpop.permute.xlu0 %165
    %v169 = vunpack.c.l.s4 1966171168
    %v170 = vunpack.c.0.s8 %v169
    %v171 = vlaneseq
    %v172 = vshrl.u32 %v171, 7
    %v173 = vsub.s32 %v170, %v172
    %v174 = vrot.slane %v166, %v173
    %v175 = vcombine.high %v174, %v174
    %v177 = vunpack.c.l.s4 1966171168
    %v178 = vunpack.c.0.s8 %v177
    %v179 = vlaneseq
    %v180 = vshrl.u32 %v179, 7
    %v181 = vsub.s32 %v178, %v180
    %v182 = vrot.slane %v174, %v181
    %v184 = vunpack.c.l.s4 1966171168
    %v185 = vunpack.c.0.s8 %v184
    %v186 = vlaneseq
    %v187 = vshrl.u32 %v186, 7
    %v188 = vsub.s32 %v185, %v187
    %v189 = vrot.slane %v175, %v188
    %v190 = vlaneseq
    %v191 = vshrl.u32 %v190, 7
    %v192 = vsub.s32 0, %v191
    %v193 = vrot.slane %v182, %v192
    %v194 = vlaneseq
    %v195 = vshrl.u32 %v194, 7
    %v196 = vsub.s32 0, %v195
    %v197 = vrot.slane %v189, %v196
    %200 = vset.pattern.permute.xlu0 2
    %201 = vperm.xlu0 %200, %v25
    %v202 = vpop.permute.xlu0 %201
    %204 = vset.pattern.permute.xlu0 2
    %205 = vperm.xlu0 %204, %v26
    %v206 = vpop.permute.xlu0 %205
    %208 = vset.pattern.permute.xlu0 2
    %209 = vperm.xlu0 %208, %v27
    %v210 = vpop.permute.xlu0 %209
    %212 = vset.pattern.permute.xlu0 2
    %213 = vperm.xlu0 %212, %v28
    %v214 = vpop.permute.xlu0 %213
    %v216 = vmul.f32 %v193, %v202
    %v217 = vmul.f32 %v193, %v206
    %v218 = vmul.f32 %v193, %v210
    %v219 = vmul.f32 %v193, %v214
    %v220 = vmul.f32 %v197, %v202
    %v221 = vmul.f32 %v197, %v206
    %v222 = vmul.f32 %v197, %v210
    %v223 = vmul.f32 %v197, %v214
    %v224 = vadd.f32 %v157, %v216
    %v225 = vadd.f32 %v158, %v217
    %v226 = vadd.f32 %v159, %v218
    %v227 = vadd.f32 %v160, %v219
    %v228 = vadd.f32 %v161, %v220
    %v229 = vadd.f32 %v162, %v221
    %v230 = vadd.f32 %v163, %v222
    %v231 = vadd.f32 %v164, %v223
    %232 = vrot.lane.b32.xlu0 %v24, 125
    %v233 = vpop.permute.xlu0 %232
    %v236 = vunpack.c.l.s4 1966171168
    %v237 = vunpack.c.0.s8 %v236
    %v238 = vlaneseq
    %v239 = vshrl.u32 %v238, 7
    %v240 = vsub.s32 %v237, %v239
    %v241 = vrot.slane %v233, %v240
    %v242 = vcombine.high %v241, %v241
    %v244 = vunpack.c.l.s4 1966171168
    %v245 = vunpack.c.0.s8 %v244
    %v246 = vlaneseq
    %v247 = vshrl.u32 %v246, 7
    %v248 = vsub.s32 %v245, %v247
    %v249 = vrot.slane %v241, %v248
    %v251 = vunpack.c.l.s4 1966171168
    %v252 = vunpack.c.0.s8 %v251
    %v253 = vlaneseq
    %v254 = vshrl.u32 %v253, 7
    %v255 = vsub.s32 %v252, %v254
    %v256 = vrot.slane %v242, %v255
    %v257 = vlaneseq
    %v258 = vshrl.u32 %v257, 7
    %v259 = vsub.s32 0, %v258
    %v260 = vrot.slane %v249, %v259
    %v261 = vlaneseq
    %v262 = vshrl.u32 %v261, 7
    %v263 = vsub.s32 0, %v262
    %v264 = vrot.slane %v256, %v263
    %267 = vset.pattern.permute.xlu0 3
    %268 = vperm.xlu0 %267, %v25
    %v269 = vpop.permute.xlu0 %268
    %271 = vset.pattern.permute.xlu0 3
    %272 = vperm.xlu0 %271, %v26
    %v273 = vpop.permute.xlu0 %272
    %275 = vset.pattern.permute.xlu0 3
    %276 = vperm.xlu0 %275, %v27
    %v277 = vpop.permute.xlu0 %276
    %279 = vset.pattern.permute.xlu0 3
    %280 = vperm.xlu0 %279, %v28
    %v281 = vpop.permute.xlu0 %280
    %v283 = vmul.f32 %v260, %v269
    %v284 = vmul.f32 %v260, %v273
    %v285 = vmul.f32 %v260, %v277
    %v286 = vmul.f32 %v260, %v281
    %v287 = vmul.f32 %v264, %v269
    %v288 = vmul.f32 %v264, %v273
    %v289 = vmul.f32 %v264, %v277
    %v290 = vmul.f32 %v264, %v281
    %v291 = vadd.f32 %v224, %v283
    %v292 = vadd.f32 %v225, %v284
    %v293 = vadd.f32 %v226, %v285
    %v294 = vadd.f32 %v227, %v286
    %v295 = vadd.f32 %v228, %v287
    %v296 = vadd.f32 %v229, %v288
    %v297 = vadd.f32 %v230, %v289
    %v298 = vadd.f32 %v231, %v290
    %299 = vrot.lane.b32.xlu0 %v24, 124
    %v300 = vpop.permute.xlu0 %299
    %v303 = vunpack.c.l.s4 1966171168
    %v304 = vunpack.c.0.s8 %v303
    %v305 = vlaneseq
    %v306 = vshrl.u32 %v305, 7
    %v307 = vsub.s32 %v304, %v306
    %v308 = vrot.slane %v300, %v307
    %v309 = vcombine.high %v308, %v308
    %v311 = vunpack.c.l.s4 1966171168
    %v312 = vunpack.c.0.s8 %v311
    %v313 = vlaneseq
    %v314 = vshrl.u32 %v313, 7
    %v315 = vsub.s32 %v312, %v314
    %v316 = vrot.slane %v308, %v315
    %v318 = vunpack.c.l.s4 1966171168
    %v319 = vunpack.c.0.s8 %v318
    %v320 = vlaneseq
    %v321 = vshrl.u32 %v320, 7
    %v322 = vsub.s32 %v319, %v321
    %v323 = vrot.slane %v309, %v322
    %v324 = vlaneseq
    %v325 = vshrl.u32 %v324, 7
    %v326 = vsub.s32 0, %v325
    %v327 = vrot.slane %v316, %v326
    %v328 = vlaneseq
    %v329 = vshrl.u32 %v328, 7
    %v330 = vsub.s32 0, %v329
    %v331 = vrot.slane %v323, %v330
    %334 = vset.pattern.permute.xlu0 4
    %335 = vperm.xlu0 %334, %v25
    %v336 = vpop.permute.xlu0 %335
    %338 = vset.pattern.permute.xlu0 4
    %339 = vperm.xlu0 %338, %v26
    %v340 = vpop.permute.xlu0 %339
    %342 = vset.pattern.permute.xlu0 4
    %343 = vperm.xlu0 %342, %v27
    %v344 = vpop.permute.xlu0 %343
    %346 = vset.pattern.permute.xlu0 4
    %347 = vperm.xlu0 %346, %v28
    %v348 = vpop.permute.xlu0 %347
    %v350 = vmul.f32 %v327, %v336
    %v351 = vmul.f32 %v327, %v340
    %v352 = vmul.f32 %v327, %v344
    %v353 = vmul.f32 %v327, %v348
    %v354 = vmul.f32 %v331, %v336
    %v355 = vmul.f32 %v331, %v340
    %v356 = vmul.f32 %v331, %v344
    %v357 = vmul.f32 %v331, %v348
    %v358 = vadd.f32 %v291, %v350
    %v359 = vadd.f32 %v292, %v351
    %v360 = vadd.f32 %v293, %v352
    %v361 = vadd.f32 %v294, %v353
    %v362 = vadd.f32 %v295, %v354
    %v363 = vadd.f32 %v296, %v355
    %v364 = vadd.f32 %v297, %v356
    %v365 = vadd.f32 %v298, %v357
    %366 = vrot.lane.b32.xlu0 %v24, 123
    %v367 = vpop.permute.xlu0 %366
    %v370 = vunpack.c.l.s4 1966171168
    %v371 = vunpack.c.0.s8 %v370
    %v372 = vlaneseq
    %v373 = vshrl.u32 %v372, 7
    %v374 = vsub.s32 %v371, %v373
    %v375 = vrot.slane %v367, %v374
    %v376 = vcombine.high %v375, %v375
    %v378 = vunpack.c.l.s4 1966171168
    %v379 = vunpack.c.0.s8 %v378
    %v380 = vlaneseq
    %v381 = vshrl.u32 %v380, 7
    %v382 = vsub.s32 %v379, %v381
    %v383 = vrot.slane %v375, %v382
    %v385 = vunpack.c.l.s4 1966171168
    %v386 = vunpack.c.0.s8 %v385
    %v387 = vlaneseq
    %v388 = vshrl.u32 %v387, 7
    %v389 = vsub.s32 %v386, %v388
    %v390 = vrot.slane %v376, %v389
    %v391 = vlaneseq
    %v392 = vshrl.u32 %v391, 7
    %v393 = vsub.s32 0, %v392
    %v394 = vrot.slane %v383, %v393
    %v395 = vlaneseq
    %v396 = vshrl.u32 %v395, 7
    %v397 = vsub.s32 0, %v396
    %v398 = vrot.slane %v390, %v397
    %401 = vset.pattern.permute.xlu0 5
    %402 = vperm.xlu0 %401, %v25
    %v403 = vpop.permute.xlu0 %402
    %405 = vset.pattern.permute.xlu0 5
    %406 = vperm.xlu0 %405, %v26
    %v407 = vpop.permute.xlu0 %406
    %409 = vset.pattern.permute.xlu0 5
    %410 = vperm.xlu0 %409, %v27
    %v411 = vpop.permute.xlu0 %410
    %413 = vset.pattern.permute.xlu0 5
    %414 = vperm.xlu0 %413, %v28
    %v415 = vpop.permute.xlu0 %414
    %v417 = vmul.f32 %v394, %v403
    %v418 = vmul.f32 %v394, %v407
    %v419 = vmul.f32 %v394, %v411
    %v420 = vmul.f32 %v394, %v415
    %v421 = vmul.f32 %v398, %v403
    %v422 = vmul.f32 %v398, %v407
    %v423 = vmul.f32 %v398, %v411
    %v424 = vmul.f32 %v398, %v415
    %v425 = vadd.f32 %v358, %v417
    %v426 = vadd.f32 %v359, %v418
    %v427 = vadd.f32 %v360, %v419
    %v428 = vadd.f32 %v361, %v420
    %v429 = vadd.f32 %v362, %v421
    %v430 = vadd.f32 %v363, %v422
    %v431 = vadd.f32 %v364, %v423
    %v432 = vadd.f32 %v365, %v424
    %433 = vrot.lane.b32.xlu0 %v24, 122
    %v434 = vpop.permute.xlu0 %433
    %v437 = vunpack.c.l.s4 1966171168
    %v438 = vunpack.c.0.s8 %v437
    %v439 = vlaneseq
    %v440 = vshrl.u32 %v439, 7
    %v441 = vsub.s32 %v438, %v440
    %v442 = vrot.slane %v434, %v441
    %v443 = vcombine.high %v442, %v442
    %v445 = vunpack.c.l.s4 1966171168
    %v446 = vunpack.c.0.s8 %v445
    %v447 = vlaneseq
    %v448 = vshrl.u32 %v447, 7
    %v449 = vsub.s32 %v446, %v448
    %v450 = vrot.slane %v442, %v449
    %v452 = vunpack.c.l.s4 1966171168
    %v453 = vunpack.c.0.s8 %v452
    %v454 = vlaneseq
    %v455 = vshrl.u32 %v454, 7
    %v456 = vsub.s32 %v453, %v455
    %v457 = vrot.slane %v443, %v456
    %v458 = vlaneseq
    %v459 = vshrl.u32 %v458, 7
    %v460 = vsub.s32 0, %v459
    %v461 = vrot.slane %v450, %v460
    %v462 = vlaneseq
    %v463 = vshrl.u32 %v462, 7
    %v464 = vsub.s32 0, %v463
    %v465 = vrot.slane %v457, %v464
    %468 = vset.pattern.permute.xlu0 6
    %469 = vperm.xlu0 %468, %v25
    %v470 = vpop.permute.xlu0 %469
    %472 = vset.pattern.permute.xlu0 6
    %473 = vperm.xlu0 %472, %v26
    %v474 = vpop.permute.xlu0 %473
    %476 = vset.pattern.permute.xlu0 6
    %477 = vperm.xlu0 %476, %v27
    %v478 = vpop.permute.xlu0 %477
    %480 = vset.pattern.permute.xlu0 6
    %481 = vperm.xlu0 %480, %v28
    %v482 = vpop.permute.xlu0 %481
    %v484 = vmul.f32 %v461, %v470
    %v485 = vmul.f32 %v461, %v474
    %v486 = vmul.f32 %v461, %v478
    %v487 = vmul.f32 %v461, %v482
    %v488 = vmul.f32 %v465, %v470
    %v489 = vmul.f32 %v465, %v474
    %v490 = vmul.f32 %v465, %v478
    %v491 = vmul.f32 %v465, %v482
    %v492 = vadd.f32 %v425, %v484
    %v493 = vadd.f32 %v426, %v485
    %v494 = vadd.f32 %v427, %v486
    %v495 = vadd.f32 %v428, %v487
    %v496 = vadd.f32 %v429, %v488
    %v497 = vadd.f32 %v430, %v489
    %v498 = vadd.f32 %v431, %v490
    %v499 = vadd.f32 %v432, %v491
    %500 = vrot.lane.b32.xlu0 %v24, 121
    %v501 = vpop.permute.xlu0 %500
    %v504 = vunpack.c.l.s4 1966171168
    %v505 = vunpack.c.0.s8 %v504
    %v506 = vlaneseq
    %v507 = vshrl.u32 %v506, 7
    %v508 = vsub.s32 %v505, %v507
    %v509 = vrot.slane %v501, %v508
    %v510 = vcombine.high %v509, %v509
    %v512 = vunpack.c.l.s4 1966171168
    %v513 = vunpack.c.0.s8 %v512
    %v514 = vlaneseq
    %v515 = vshrl.u32 %v514, 7
    %v516 = vsub.s32 %v513, %v515
    %v517 = vrot.slane %v509, %v516
    %v519 = vunpack.c.l.s4 1966171168
    %v520 = vunpack.c.0.s8 %v519
    %v521 = vlaneseq
    %v522 = vshrl.u32 %v521, 7
    %v523 = vsub.s32 %v520, %v522
    %v524 = vrot.slane %v510, %v523
    %v525 = vlaneseq
    %v526 = vshrl.u32 %v525, 7
    %v527 = vsub.s32 0, %v526
    %v528 = vrot.slane %v517, %v527
    %v529 = vlaneseq
    %v530 = vshrl.u32 %v529, 7
    %v531 = vsub.s32 0, %v530
    %v532 = vrot.slane %v524, %v531
    %535 = vset.pattern.permute.xlu0 7
    %536 = vperm.xlu0 %535, %v25
    %v537 = vpop.permute.xlu0 %536
    %539 = vset.pattern.permute.xlu0 7
    %540 = vperm.xlu0 %539, %v26
    %v541 = vpop.permute.xlu0 %540
    %543 = vset.pattern.permute.xlu0 7
    %544 = vperm.xlu0 %543, %v27
    %v545 = vpop.permute.xlu0 %544
    %547 = vset.pattern.permute.xlu0 7
    %548 = vperm.xlu0 %547, %v28
    %v549 = vpop.permute.xlu0 %548
    %v551 = vmul.f32 %v528, %v537
    %v552 = vmul.f32 %v528, %v541
    %v553 = vmul.f32 %v528, %v545
    %v554 = vmul.f32 %v528, %v549
    %v555 = vmul.f32 %v532, %v537
    %v556 = vmul.f32 %v532, %v541
    %v557 = vmul.f32 %v532, %v545
    %v558 = vmul.f32 %v532, %v549
    %v559 = vadd.f32 %v492, %v551
    %v560 = vadd.f32 %v493, %v552
    %v561 = vadd.f32 %v494, %v553
    %v562 = vadd.f32 %v495, %v554
    %v563 = vadd.f32 %v496, %v555
    %v564 = vadd.f32 %v497, %v556
    %v565 = vadd.f32 %v498, %v557
    %v566 = vadd.f32 %v499, %v558
    %567 = vrot.lane.b32.xlu0 %v24, 120
    %v568 = vpop.permute.xlu0 %567
    %v571 = vunpack.c.l.s4 1966171168
    %v572 = vunpack.c.0.s8 %v571
    %v573 = vlaneseq
    %v574 = vshrl.u32 %v573, 7
    %v575 = vsub.s32 %v572, %v574
    %v576 = vrot.slane %v568, %v575
    %v577 = vcombine.high %v576, %v576
    %v579 = vunpack.c.l.s4 1966171168
    %v580 = vunpack.c.0.s8 %v579
    %v581 = vlaneseq
    %v582 = vshrl.u32 %v581, 7
    %v583 = vsub.s32 %v580, %v582
    %v584 = vrot.slane %v576, %v583
    %v586 = vunpack.c.l.s4 1966171168
    %v587 = vunpack.c.0.s8 %v586
    %v588 = vlaneseq
    %v589 = vshrl.u32 %v588, 7
    %v590 = vsub.s32 %v587, %v589
    %v591 = vrot.slane %v577, %v590
    %v592 = vlaneseq
    %v593 = vshrl.u32 %v592, 7
    %v594 = vsub.s32 0, %v593
    %v595 = vrot.slane %v584, %v594
    %v596 = vlaneseq
    %v597 = vshrl.u32 %v596, 7
    %v598 = vsub.s32 0, %v597
    %v599 = vrot.slane %v591, %v598
    %602 = vset.pattern.permute.xlu0 8
    %603 = vperm.xlu0 %602, %v25
    %v604 = vpop.permute.xlu0 %603
    %606 = vset.pattern.permute.xlu0 8
    %607 = vperm.xlu0 %606, %v26
    %v608 = vpop.permute.xlu0 %607
    %610 = vset.pattern.permute.xlu0 8
    %611 = vperm.xlu0 %610, %v27
    %v612 = vpop.permute.xlu0 %611
    %614 = vset.pattern.permute.xlu0 8
    %615 = vperm.xlu0 %614, %v28
    %v616 = vpop.permute.xlu0 %615
    %v618 = vmul.f32 %v595, %v604
    %v619 = vmul.f32 %v595, %v608
    %v620 = vmul.f32 %v595, %v612
    %v621 = vmul.f32 %v595, %v616
    %v622 = vmul.f32 %v599, %v604
    %v623 = vmul.f32 %v599, %v608
    %v624 = vmul.f32 %v599, %v612
    %v625 = vmul.f32 %v599, %v616
    %v626 = vadd.f32 %v559, %v618
    %v627 = vadd.f32 %v560, %v619
    %v628 = vadd.f32 %v561, %v620
    %v629 = vadd.f32 %v562, %v621
    %v630 = vadd.f32 %v563, %v622
    %v631 = vadd.f32 %v564, %v623
    %v632 = vadd.f32 %v565, %v624
    %v633 = vadd.f32 %v566, %v625
    %634 = vrot.lane.b32.xlu0 %v24, 119
    %v635 = vpop.permute.xlu0 %634
    %v638 = vunpack.c.l.s4 1966171168
    %v639 = vunpack.c.0.s8 %v638
    %v640 = vlaneseq
    %v641 = vshrl.u32 %v640, 7
    %v642 = vsub.s32 %v639, %v641
    %v643 = vrot.slane %v635, %v642
    %v644 = vcombine.high %v643, %v643
    %v646 = vunpack.c.l.s4 1966171168
    %v647 = vunpack.c.0.s8 %v646
    %v648 = vlaneseq
    %v649 = vshrl.u32 %v648, 7
    %v650 = vsub.s32 %v647, %v649
    %v651 = vrot.slane %v643, %v650
    %v653 = vunpack.c.l.s4 1966171168
    %v654 = vunpack.c.0.s8 %v653
    %v655 = vlaneseq
    %v656 = vshrl.u32 %v655, 7
    %v657 = vsub.s32 %v654, %v656
    %v658 = vrot.slane %v644, %v657
    %v659 = vlaneseq
    %v660 = vshrl.u32 %v659, 7
    %v661 = vsub.s32 0, %v660
    %v662 = vrot.slane %v651, %v661
    %v663 = vlaneseq
    %v664 = vshrl.u32 %v663, 7
    %v665 = vsub.s32 0, %v664
    %v666 = vrot.slane %v658, %v665
    %669 = vset.pattern.permute.xlu0 9
    %670 = vperm.xlu0 %669, %v25
    %v671 = vpop.permute.xlu0 %670
    %673 = vset.pattern.permute.xlu0 9
    %674 = vperm.xlu0 %673, %v26
    %v675 = vpop.permute.xlu0 %674
    %677 = vset.pattern.permute.xlu0 9
    %678 = vperm.xlu0 %677, %v27
    %v679 = vpop.permute.xlu0 %678
    %681 = vset.pattern.permute.xlu0 9
    %682 = vperm.xlu0 %681, %v28
    %v683 = vpop.permute.xlu0 %682
    %v685 = vmul.f32 %v662, %v671
    %v686 = vmul.f32 %v662, %v675
    %v687 = vmul.f32 %v662, %v679
    %v688 = vmul.f32 %v662, %v683
    %v689 = vmul.f32 %v666, %v671
    %v690 = vmul.f32 %v666, %v675
    %v691 = vmul.f32 %v666, %v679
    %v692 = vmul.f32 %v666, %v683
    %v693 = vadd.f32 %v626, %v685
    %v694 = vadd.f32 %v627, %v686
    %v695 = vadd.f32 %v628, %v687
    %v696 = vadd.f32 %v629, %v688
    %v697 = vadd.f32 %v630, %v689
    %v698 = vadd.f32 %v631, %v690
    %v699 = vadd.f32 %v632, %v691
    %v700 = vadd.f32 %v633, %v692
    %701 = vrot.lane.b32.xlu0 %v24, 118
    %v702 = vpop.permute.xlu0 %701
    %v705 = vunpack.c.l.s4 1966171168
    %v706 = vunpack.c.0.s8 %v705
    %v707 = vlaneseq
    %v708 = vshrl.u32 %v707, 7
    %v709 = vsub.s32 %v706, %v708
    %v710 = vrot.slane %v702, %v709
    %v711 = vcombine.high %v710, %v710
    %v713 = vunpack.c.l.s4 1966171168
    %v714 = vunpack.c.0.s8 %v713
    %v715 = vlaneseq
    %v716 = vshrl.u32 %v715, 7
    %v717 = vsub.s32 %v714, %v716
    %v718 = vrot.slane %v710, %v717
    %v720 = vunpack.c.l.s4 1966171168
    %v721 = vunpack.c.0.s8 %v720
    %v722 = vlaneseq
    %v723 = vshrl.u32 %v722, 7
    %v724 = vsub.s32 %v721, %v723
    %v725 = vrot.slane %v711, %v724
    %v726 = vlaneseq
    %v727 = vshrl.u32 %v726, 7
    %v728 = vsub.s32 0, %v727
    %v729 = vrot.slane %v718, %v728
    %v730 = vlaneseq
    %v731 = vshrl.u32 %v730, 7
    %v732 = vsub.s32 0, %v731
    %v733 = vrot.slane %v725, %v732
    %736 = vset.pattern.permute.xlu0 10
    %737 = vperm.xlu0 %736, %v25
    %v738 = vpop.permute.xlu0 %737
    %740 = vset.pattern.permute.xlu0 10
    %741 = vperm.xlu0 %740, %v26
    %v742 = vpop.permute.xlu0 %741
    %744 = vset.pattern.permute.xlu0 10
    %745 = vperm.xlu0 %744, %v27
    %v746 = vpop.permute.xlu0 %745
    %748 = vset.pattern.permute.xlu0 10
    %749 = vperm.xlu0 %748, %v28
    %v750 = vpop.permute.xlu0 %749
    %v752 = vmul.f32 %v729, %v738
    %v753 = vmul.f32 %v729, %v742
    %v754 = vmul.f32 %v729, %v746
    %v755 = vmul.f32 %v729, %v750
    %v756 = vmul.f32 %v733, %v738
    %v757 = vmul.f32 %v733, %v742
    %v758 = vmul.f32 %v733, %v746
    %v759 = vmul.f32 %v733, %v750
    %v760 = vadd.f32 %v693, %v752
    %v761 = vadd.f32 %v694, %v753
    %v762 = vadd.f32 %v695, %v754
    %v763 = vadd.f32 %v696, %v755
    %v764 = vadd.f32 %v697, %v756
    %v765 = vadd.f32 %v698, %v757
    %v766 = vadd.f32 %v699, %v758
    %v767 = vadd.f32 %v700, %v759
    %768 = vrot.lane.b32.xlu0 %v24, 117
    %v769 = vpop.permute.xlu0 %768
    %v772 = vunpack.c.l.s4 1966171168
    %v773 = vunpack.c.0.s8 %v772
    %v774 = vlaneseq
    %v775 = vshrl.u32 %v774, 7
    %v776 = vsub.s32 %v773, %v775
    %v777 = vrot.slane %v769, %v776
    %v778 = vcombine.high %v777, %v777
    %v780 = vunpack.c.l.s4 1966171168
    %v781 = vunpack.c.0.s8 %v780
    %v782 = vlaneseq
    %v783 = vshrl.u32 %v782, 7
    %v784 = vsub.s32 %v781, %v783
    %v785 = vrot.slane %v777, %v784
    %v787 = vunpack.c.l.s4 1966171168
    %v788 = vunpack.c.0.s8 %v787
    %v789 = vlaneseq
    %v790 = vshrl.u32 %v789, 7
    %v791 = vsub.s32 %v788, %v790
    %v792 = vrot.slane %v778, %v791
    %v793 = vlaneseq
    %v794 = vshrl.u32 %v793, 7
    %v795 = vsub.s32 0, %v794
    %v796 = vrot.slane %v785, %v795
    %v797 = vlaneseq
    %v798 = vshrl.u32 %v797, 7
    %v799 = vsub.s32 0, %v798
    %v800 = vrot.slane %v792, %v799
    %803 = vset.pattern.permute.xlu0 11
    %804 = vperm.xlu0 %803, %v25
    %v805 = vpop.permute.xlu0 %804
    %807 = vset.pattern.permute.xlu0 11
    %808 = vperm.xlu0 %807, %v26
    %v809 = vpop.permute.xlu0 %808
    %811 = vset.pattern.permute.xlu0 11
    %812 = vperm.xlu0 %811, %v27
    %v813 = vpop.permute.xlu0 %812
    %815 = vset.pattern.permute.xlu0 11
    %816 = vperm.xlu0 %815, %v28
    %v817 = vpop.permute.xlu0 %816
    %v819 = vmul.f32 %v796, %v805
    %v820 = vmul.f32 %v796, %v809
    %v821 = vmul.f32 %v796, %v813
    %v822 = vmul.f32 %v796, %v817
    %v823 = vmul.f32 %v800, %v805
    %v824 = vmul.f32 %v800, %v809
    %v825 = vmul.f32 %v800, %v813
    %v826 = vmul.f32 %v800, %v817
    %v827 = vadd.f32 %v760, %v819
    %v828 = vadd.f32 %v761, %v820
    %v829 = vadd.f32 %v762, %v821
    %v830 = vadd.f32 %v763, %v822
    %v831 = vadd.f32 %v764, %v823
    %v832 = vadd.f32 %v765, %v824
    %v833 = vadd.f32 %v766, %v825
    %v834 = vadd.f32 %v767, %v826
    %835 = vrot.lane.b32.xlu0 %v24, 116
    %v836 = vpop.permute.xlu0 %835
    %v839 = vunpack.c.l.s4 1966171168
    %v840 = vunpack.c.0.s8 %v839
    %v841 = vlaneseq
    %v842 = vshrl.u32 %v841, 7
    %v843 = vsub.s32 %v840, %v842
    %v844 = vrot.slane %v836, %v843
    %v845 = vcombine.high %v844, %v844
    %v847 = vunpack.c.l.s4 1966171168
    %v848 = vunpack.c.0.s8 %v847
    %v849 = vlaneseq
    %v850 = vshrl.u32 %v849, 7
    %v851 = vsub.s32 %v848, %v850
    %v852 = vrot.slane %v844, %v851
    %v854 = vunpack.c.l.s4 1966171168
    %v855 = vunpack.c.0.s8 %v854
    %v856 = vlaneseq
    %v857 = vshrl.u32 %v856, 7
    %v858 = vsub.s32 %v855, %v857
    %v859 = vrot.slane %v845, %v858
    %v860 = vlaneseq
    %v861 = vshrl.u32 %v860, 7
    %v862 = vsub.s32 0, %v861
    %v863 = vrot.slane %v852, %v862
    %v864 = vlaneseq
    %v865 = vshrl.u32 %v864, 7
    %v866 = vsub.s32 0, %v865
    %v867 = vrot.slane %v859, %v866
    %870 = vset.pattern.permute.xlu0 12
    %871 = vperm.xlu0 %870, %v25
    %v872 = vpop.permute.xlu0 %871
    %874 = vset.pattern.permute.xlu0 12
    %875 = vperm.xlu0 %874, %v26
    %v876 = vpop.permute.xlu0 %875
    %878 = vset.pattern.permute.xlu0 12
    %879 = vperm.xlu0 %878, %v27
    %v880 = vpop.permute.xlu0 %879
    %882 = vset.pattern.permute.xlu0 12
    %883 = vperm.xlu0 %882, %v28
    %v884 = vpop.permute.xlu0 %883
    %v886 = vmul.f32 %v863, %v872
    %v887 = vmul.f32 %v863, %v876
    %v888 = vmul.f32 %v863, %v880
    %v889 = vmul.f32 %v863, %v884
    %v890 = vmul.f32 %v867, %v872
    %v891 = vmul.f32 %v867, %v876
    %v892 = vmul.f32 %v867, %v880
    %v893 = vmul.f32 %v867, %v884
    %v894 = vadd.f32 %v827, %v886
    %v895 = vadd.f32 %v828, %v887
    %v896 = vadd.f32 %v829, %v888
    %v897 = vadd.f32 %v830, %v889
    %v898 = vadd.f32 %v831, %v890
    %v899 = vadd.f32 %v832, %v891
    %v900 = vadd.f32 %v833, %v892
    %v901 = vadd.f32 %v834, %v893
    %902 = vrot.lane.b32.xlu0 %v24, 115
    %v903 = vpop.permute.xlu0 %902
    %v906 = vunpack.c.l.s4 1966171168
    %v907 = vunpack.c.0.s8 %v906
    %v908 = vlaneseq
    %v909 = vshrl.u32 %v908, 7
    %v910 = vsub.s32 %v907, %v909
    %v911 = vrot.slane %v903, %v910
    %v912 = vcombine.high %v911, %v911
    %v914 = vunpack.c.l.s4 1966171168
    %v915 = vunpack.c.0.s8 %v914
    %v916 = vlaneseq
    %v917 = vshrl.u32 %v916, 7
    %v918 = vsub.s32 %v915, %v917
    %v919 = vrot.slane %v911, %v918
    %v921 = vunpack.c.l.s4 1966171168
    %v922 = vunpack.c.0.s8 %v921
    %v923 = vlaneseq
    %v924 = vshrl.u32 %v923, 7
    %v925 = vsub.s32 %v922, %v924
    %v926 = vrot.slane %v912, %v925
    %v927 = vlaneseq
    %v928 = vshrl.u32 %v927, 7
    %v929 = vsub.s32 0, %v928
    %v930 = vrot.slane %v919, %v929
    %v931 = vlaneseq
    %v932 = vshrl.u32 %v931, 7
    %v933 = vsub.s32 0, %v932
    %v934 = vrot.slane %v926, %v933
    %937 = vset.pattern.permute.xlu0 13
    %938 = vperm.xlu0 %937, %v25
    %v939 = vpop.permute.xlu0 %938
    %941 = vset.pattern.permute.xlu0 13
    %942 = vperm.xlu0 %941, %v26
    %v943 = vpop.permute.xlu0 %942
    %945 = vset.pattern.permute.xlu0 13
    %946 = vperm.xlu0 %945, %v27
    %v947 = vpop.permute.xlu0 %946
    %949 = vset.pattern.permute.xlu0 13
    %950 = vperm.xlu0 %949, %v28
    %v951 = vpop.permute.xlu0 %950
    %v953 = vmul.f32 %v930, %v939
    %v954 = vmul.f32 %v930, %v943
    %v955 = vmul.f32 %v930, %v947
    %v956 = vmul.f32 %v930, %v951
    %v957 = vmul.f32 %v934, %v939
    %v958 = vmul.f32 %v934, %v943
    %v959 = vmul.f32 %v934, %v947
    %v960 = vmul.f32 %v934, %v951
    %v961 = vadd.f32 %v894, %v953
    %v962 = vadd.f32 %v895, %v954
    %v963 = vadd.f32 %v896, %v955
    %v964 = vadd.f32 %v897, %v956
    %v965 = vadd.f32 %v898, %v957
    %v966 = vadd.f32 %v899, %v958
    %v967 = vadd.f32 %v900, %v959
    %v968 = vadd.f32 %v901, %v960
    %969 = vrot.lane.b32.xlu0 %v24, 114
    %v970 = vpop.permute.xlu0 %969
    %v973 = vunpack.c.l.s4 1966171168
    %v974 = vunpack.c.0.s8 %v973
    %v975 = vlaneseq
    %v976 = vshrl.u32 %v975, 7
    %v977 = vsub.s32 %v974, %v976
    %v978 = vrot.slane %v970, %v977
    %v979 = vcombine.high %v978, %v978
    %v981 = vunpack.c.l.s4 1966171168
    %v982 = vunpack.c.0.s8 %v981
    %v983 = vlaneseq
    %v984 = vshrl.u32 %v983, 7
    %v985 = vsub.s32 %v982, %v984
    %v986 = vrot.slane %v978, %v985
    %v988 = vunpack.c.l.s4 1966171168
    %v989 = vunpack.c.0.s8 %v988
    %v990 = vlaneseq
    %v991 = vshrl.u32 %v990, 7
    %v992 = vsub.s32 %v989, %v991
    %v993 = vrot.slane %v979, %v992
    %v994 = vlaneseq
    %v995 = vshrl.u32 %v994, 7
    %v996 = vsub.s32 0, %v995
    %v997 = vrot.slane %v986, %v996
    %v998 = vlaneseq
    %v999 = vshrl.u32 %v998, 7
    %v1000 = vsub.s32 0, %v999
    %v1001 = vrot.slane %v993, %v1000
    %1004 = vset.pattern.permute.xlu0 14
    %1005 = vperm.xlu0 %1004, %v25
    %v1006 = vpop.permute.xlu0 %1005
    %1008 = vset.pattern.permute.xlu0 14
    %1009 = vperm.xlu0 %1008, %v26
    %v1010 = vpop.permute.xlu0 %1009
    %1012 = vset.pattern.permute.xlu0 14
    %1013 = vperm.xlu0 %1012, %v27
    %v1014 = vpop.permute.xlu0 %1013
    %1016 = vset.pattern.permute.xlu0 14
    %1017 = vperm.xlu0 %1016, %v28
    %v1018 = vpop.permute.xlu0 %1017
    %v1020 = vmul.f32 %v997, %v1006
    %v1021 = vmul.f32 %v997, %v1010
    %v1022 = vmul.f32 %v997, %v1014
    %v1023 = vmul.f32 %v997, %v1018
    %v1024 = vmul.f32 %v1001, %v1006
    %v1025 = vmul.f32 %v1001, %v1010
    %v1026 = vmul.f32 %v1001, %v1014
    %v1027 = vmul.f32 %v1001, %v1018
    %v1028 = vadd.f32 %v961, %v1020
    %v1029 = vadd.f32 %v962, %v1021
    %v1030 = vadd.f32 %v963, %v1022
    %v1031 = vadd.f32 %v964, %v1023
    %v1032 = vadd.f32 %v965, %v1024
    %v1033 = vadd.f32 %v966, %v1025
    %v1034 = vadd.f32 %v967, %v1026
    %v1035 = vadd.f32 %v968, %v1027
    %1036 = vrot.lane.b32.xlu0 %v24, 113
    %v1037 = vpop.permute.xlu0 %1036
    %v1040 = vunpack.c.l.s4 1966171168
    %v1041 = vunpack.c.0.s8 %v1040
    %v1042 = vlaneseq
    %v1043 = vshrl.u32 %v1042, 7
    %v1044 = vsub.s32 %v1041, %v1043
    %v1045 = vrot.slane %v1037, %v1044
    %v1046 = vcombine.high %v1045, %v1045
    %v1048 = vunpack.c.l.s4 1966171168
    %v1049 = vunpack.c.0.s8 %v1048
    %v1050 = vlaneseq
    %v1051 = vshrl.u32 %v1050, 7
    %v1052 = vsub.s32 %v1049, %v1051
    %v1053 = vrot.slane %v1045, %v1052
    %v1055 = vunpack.c.l.s4 1966171168
    %v1056 = vunpack.c.0.s8 %v1055
    %v1057 = vlaneseq
    %v1058 = vshrl.u32 %v1057, 7
    %v1059 = vsub.s32 %v1056, %v1058
    %v1060 = vrot.slane %v1046, %v1059
    %v1061 = vlaneseq
    %v1062 = vshrl.u32 %v1061, 7
    %v1063 = vsub.s32 0, %v1062
    %v1064 = vrot.slane %v1053, %v1063
    %v1065 = vlaneseq
    %v1066 = vshrl.u32 %v1065, 7
    %v1067 = vsub.s32 0, %v1066
    %v1068 = vrot.slane %v1060, %v1067
    %1071 = vset.pattern.permute.xlu0 15
    %1072 = vperm.xlu0 %1071, %v25
    %v1073 = vpop.permute.xlu0 %1072
    %1075 = vset.pattern.permute.xlu0 15
    %1076 = vperm.xlu0 %1075, %v26
    %v1077 = vpop.permute.xlu0 %1076
    %1079 = vset.pattern.permute.xlu0 15
    %1080 = vperm.xlu0 %1079, %v27
    %v1081 = vpop.permute.xlu0 %1080
    %1083 = vset.pattern.permute.xlu0 15
    %1084 = vperm.xlu0 %1083, %v28
    %v1085 = vpop.permute.xlu0 %1084
    %v1087 = vmul.f32 %v1064, %v1073
    %v1088 = vmul.f32 %v1064, %v1077
    %v1089 = vmul.f32 %v1064, %v1081
    %v1090 = vmul.f32 %v1064, %v1085
    %v1091 = vmul.f32 %v1068, %v1073
    %v1092 = vmul.f32 %v1068, %v1077
    %v1093 = vmul.f32 %v1068, %v1081
    %v1094 = vmul.f32 %v1068, %v1085
    %v1095 = vadd.f32 %v1028, %v1087
    %v1096 = vadd.f32 %v1029, %v1088
    %v1097 = vadd.f32 %v1030, %v1089
    %v1098 = vadd.f32 %v1031, %v1090
    %v1099 = vadd.f32 %v1032, %v1091
    %v1100 = vadd.f32 %v1033, %v1092
    %v1101 = vadd.f32 %v1034, %v1093
    %v1102 = vadd.f32 %v1035, %v1094
    %v1103 = vlaneseq
    %v1104 = vand.u32 %v1103, 127
    %vm1105 = vcmp.lt.s32.totalorder %v1104, 49
    %v1106 = vsel %vm1105, 1, 0
    %vm1107 = vcmp.eq.s32.totalorder %v1106, 1
    %v1108 = vsel %vm1107, %v1095, 0.0
    %v1109 = vsel %vm1107, %v1096, 0.0
    %v1110 = vsel %vm1107, %v1097, 0.0
    %v1111 = vsel %vm1107, %v1098, 0.0
    %v1112 = vsel %vm1107, %v1099, 0.0
    %v1113 = vsel %vm1107, %v1100, 0.0
    %v1114 = vsel %vm1107, %v1101, 0.0
    %v1115 = vsel %vm1107, %v1102, 0.0
    %1116 = vadd.xlane.f32.xlu0 %v1108
    %v1117 = vpop.xlane.xlu0 %1116
    %1118 = vadd.xlane.f32.xlu0 %v1109
    %v1119 = vpop.xlane.xlu0 %1118
    %1120 = vadd.xlane.f32.xlu0 %v1110
    %v1121 = vpop.xlane.xlu0 %1120
    %1122 = vadd.xlane.f32.xlu0 %v1111
    %v1123 = vpop.xlane.xlu0 %1122
    %1124 = vadd.xlane.f32.xlu0 %v1112
    %v1125 = vpop.xlane.xlu0 %1124
    %1126 = vadd.xlane.f32.xlu0 %v1113
    %v1127 = vpop.xlane.xlu0 %1126
    %1128 = vadd.xlane.f32.xlu0 %v1114
    %v1129 = vpop.xlane.xlu0 %1128
    %1130 = vadd.xlane.f32.xlu0 %v1115
    %v1131 = vpop.xlane.xlu0 %1130
    %v1132 = vadd.f32 %v1117, %v1125
    %v1133 = vadd.f32 %v1119, %v1127
    %v1134 = vadd.f32 %v1121, %v1129
    %v1135 = vadd.f32 %v1123, %v1131
    %v1136 = vmul.f32 %v1132, 0.010204081
    %v1137 = vmul.f32 %v1133, 0.010204081
    %v1138 = vmul.f32 %v1134, 0.010204081
    %v1139 = vmul.f32 %v1135, 0.010204081
    %v1140 = vsub.f32 %v1095, %v1136
    %v1141 = vsub.f32 %v1096, %v1137
    %v1142 = vsub.f32 %v1097, %v1138
    %v1143 = vsub.f32 %v1098, %v1139
    %v1144 = vsub.f32 %v1099, %v1136
    %v1145 = vsub.f32 %v1100, %v1137
    %v1146 = vsub.f32 %v1101, %v1138
    %v1147 = vsub.f32 %v1102, %v1139
    %v1148 = vsel %vm1107, %v1140, 0.0
    %v1149 = vsel %vm1107, %v1141, 0.0
    %v1150 = vsel %vm1107, %v1142, 0.0
    %v1151 = vsel %vm1107, %v1143, 0.0
    %v1152 = vsel %vm1107, %v1144, 0.0
    %v1153 = vsel %vm1107, %v1145, 0.0
    %v1154 = vsel %vm1107, %v1146, 0.0
    %v1155 = vsel %vm1107, %v1147, 0.0
    %v1156 = vmul.f32 %v1148, %v1148
    %v1157 = vmul.f32 %v1149, %v1149
    %v1158 = vmul.f32 %v1150, %v1150
    %v1159 = vmul.f32 %v1151, %v1151
    %v1160 = vmul.f32 %v1152, %v1152
    %v1161 = vmul.f32 %v1153, %v1153
    %v1162 = vmul.f32 %v1154, %v1154
    %v1163 = vmul.f32 %v1155, %v1155
    %1164 = vadd.xlane.f32.xlu0 %v1156
    %v1165 = vpop.xlane.xlu0 %1164
    %1166 = vadd.xlane.f32.xlu0 %v1157
    %v1167 = vpop.xlane.xlu0 %1166
    %1168 = vadd.xlane.f32.xlu0 %v1158
    %v1169 = vpop.xlane.xlu0 %1168
    %1170 = vadd.xlane.f32.xlu0 %v1159
    %v1171 = vpop.xlane.xlu0 %1170
    %1172 = vadd.xlane.f32.xlu0 %v1160
    %v1173 = vpop.xlane.xlu0 %1172
    %1174 = vadd.xlane.f32.xlu0 %v1161
    %v1175 = vpop.xlane.xlu0 %1174
    %1176 = vadd.xlane.f32.xlu0 %v1162
    %v1177 = vpop.xlane.xlu0 %1176
    %1178 = vadd.xlane.f32.xlu0 %v1163
    %v1179 = vpop.xlane.xlu0 %1178
    %v1180 = vadd.f32 %v1165, %v1173
    %v1181 = vadd.f32 %v1167, %v1175
    %v1182 = vadd.f32 %v1169, %v1177
    %v1183 = vadd.f32 %v1171, %v1179
    %v1184 = vmul.f32 %v1180, 0.010204081
    %v1185 = vmul.f32 %v1181, 0.010204081
    %v1186 = vmul.f32 %v1182, 0.010204081
    %v1187 = vmul.f32 %v1183, 0.010204081
    %v1188 = vadd.f32 %v1184, 1e-05
    %v1189 = vadd.f32 %v1185, 1e-05
    %v1190 = vadd.f32 %v1186, 1e-05
    %v1191 = vadd.f32 %v1187, 1e-05
    %v1192 = vrsqrt.pop %v1188
    %v1193 = vrsqrt.pop %v1189
    %v1194 = vrsqrt.pop %v1190
    %v1195 = vrsqrt.pop %v1191
    %v1196 = vld [vmem:[%s2] sm:$0xff]
    %v1197 = vld [vmem:[%s2 + $0x8] sm:$0xff]
    %v1198 = vld [vmem:[%s2 + $0x10] sm:$0xff]
    %v1199 = vld [vmem:[%s2 + $0x18] sm:$0xff]
    %v1200 = vmul.f32 %v1196, %v1192
    %v1201 = vmul.f32 %v1197, %v1193
    %v1202 = vmul.f32 %v1198, %v1194
    %v1203 = vmul.f32 %v1199, %v1195
    %v1204 = vld [vmem:[%s3] sm:$0xff]
    %v1205 = vld [vmem:[%s3 + $0x8] sm:$0xff]
    %v1206 = vld [vmem:[%s3 + $0x10] sm:$0xff]
    %v1207 = vld [vmem:[%s3 + $0x18] sm:$0xff]
    %v1208 = vmul.f32 %v1136, %v1200
    %v1209 = vmul.f32 %v1137, %v1201
    %v1210 = vmul.f32 %v1138, %v1202
    %v1211 = vmul.f32 %v1139, %v1203
    %v1212 = vsub.f32 %v1204, %v1208
    %v1213 = vsub.f32 %v1205, %v1209
    %v1214 = vsub.f32 %v1206, %v1210
    %v1215 = vsub.f32 %v1207, %v1211
    %1217 = vset.pattern.permute.xlu0 0
    %1218 = vperm.xlu0 %1217, %v1200
    %v1219 = vpop.permute.xlu0 %1218
    %1222 = vset.pattern.permute.xlu0 0
    %1223 = vperm.xlu0 %1222, %v1201
    %v1224 = vpop.permute.xlu0 %1223
    %1227 = vset.pattern.permute.xlu0 0
    %1228 = vperm.xlu0 %1227, %v1202
    %v1229 = vpop.permute.xlu0 %1228
    %1232 = vset.pattern.permute.xlu0 0
    %1233 = vperm.xlu0 %1232, %v1203
    %v1234 = vpop.permute.xlu0 %1233
    %v1236 = vmul.f32 %v1095, %v1219
    %v1237 = vmul.f32 %v1096, %v1224
    %v1238 = vmul.f32 %v1097, %v1229
    %v1239 = vmul.f32 %v1098, %v1234
    %v1240 = vmul.f32 %v1099, %v1219
    %v1241 = vmul.f32 %v1100, %v1224
    %v1242 = vmul.f32 %v1101, %v1229
    %v1243 = vmul.f32 %v1102, %v1234
    %1245 = vset.pattern.permute.xlu0 0
    %1246 = vperm.xlu0 %1245, %v1212
    %v1247 = vpop.permute.xlu0 %1246
    %1250 = vset.pattern.permute.xlu0 0
    %1251 = vperm.xlu0 %1250, %v1213
    %v1252 = vpop.permute.xlu0 %1251
    %1255 = vset.pattern.permute.xlu0 0
    %1256 = vperm.xlu0 %1255, %v1214
    %v1257 = vpop.permute.xlu0 %1256
    %1260 = vset.pattern.permute.xlu0 0
    %1261 = vperm.xlu0 %1260, %v1215
    %v1262 = vpop.permute.xlu0 %1261
    %v1264 = vadd.f32 %v1236, %v1247
    %v1265 = vadd.f32 %v1237, %v1252
    %v1266 = vadd.f32 %v1238, %v1257
    %v1267 = vadd.f32 %v1239, %v1262
    %v1268 = vadd.f32 %v1240, %v1247
    %v1269 = vadd.f32 %v1241, %v1252
    %v1270 = vadd.f32 %v1242, %v1257
    %v1271 = vadd.f32 %v1243, %v1262
    %v1272 = vmax.f32 %v1264, 0.0
    %v1273 = vmax.f32 %v1265, 0.0
    %v1274 = vmax.f32 %v1266, 0.0
    %v1275 = vmax.f32 %v1267, 0.0
    %v1276 = vmax.f32 %v1268, 0.0
    %v1277 = vmax.f32 %v1269, 0.0
    %v1278 = vmax.f32 %v1270, 0.0
    %v1279 = vmax.f32 %v1271, 0.0
    %v1280 = vsel %vm1107, %v1272, 0.0
    %v1281 = vsel %vm1107, %v1273, 0.0
    %v1282 = vsel %vm1107, %v1274, 0.0
    %v1283 = vsel %vm1107, %v1275, 0.0
    %v1284 = vsel %vm1107, %v1276, 0.0
    %v1285 = vsel %vm1107, %v1277, 0.0
    %v1286 = vsel %vm1107, %v1278, 0.0
    %v1287 = vsel %vm1107, %v1279, 0.0
    %1288 = vadd.xlane.f32.xlu0 %v1280
    %v1289 = vpop.xlane.xlu0 %1288
    %1290 = vadd.xlane.f32.xlu0 %v1281
    %v1291 = vpop.xlane.xlu0 %1290
    %1292 = vadd.xlane.f32.xlu0 %v1282
    %v1293 = vpop.xlane.xlu0 %1292
    %1294 = vadd.xlane.f32.xlu0 %v1283
    %v1295 = vpop.xlane.xlu0 %1294
    %1296 = vadd.xlane.f32.xlu0 %v1284
    %v1297 = vpop.xlane.xlu0 %1296
    %1298 = vadd.xlane.f32.xlu0 %v1285
    %v1299 = vpop.xlane.xlu0 %1298
    %1300 = vadd.xlane.f32.xlu0 %v1286
    %v1301 = vpop.xlane.xlu0 %1300
    %1302 = vadd.xlane.f32.xlu0 %v1287
    %v1303 = vpop.xlane.xlu0 %1302
    %v1304 = vmul.f32 %v1289, 0.020408163
    %v1305 = vmul.f32 %v1291, 0.020408163
    %v1306 = vmul.f32 %v1293, 0.020408163
    %v1307 = vmul.f32 %v1295, 0.020408163
    %v1308 = vmul.f32 %v1297, 0.020408163
    %v1309 = vmul.f32 %v1299, 0.020408163
    %v1310 = vmul.f32 %v1301, 0.020408163
    %v1311 = vmul.f32 %v1303, 0.020408163
    %v1312 = vld [vmem:[%s4] sm:$0xff]
    %v1313 = vld [vmem:[%s4 + $0x8] sm:$0xff]
    %v1314 = vld [vmem:[%s4 + $0x10] sm:$0xff]
    %v1315 = vld [vmem:[%s4 + $0x18] sm:$0xff]
    %v1316 = vmul.f32 %v1304, %v1312
    %v1317 = vmul.f32 %v1305, %v1313
    %v1318 = vmul.f32 %v1306, %v1314
    %v1319 = vmul.f32 %v1307, %v1315
    %v1320 = vmul.f32 %v1308, %v1312
    %v1321 = vmul.f32 %v1309, %v1313
    %v1322 = vmul.f32 %v1310, %v1314
    %v1323 = vmul.f32 %v1311, %v1315
    %vm1324 = vcmask 15360
    %v1325 = vsel %vm1324, %v1316, 0.0
    %v1326 = vsel %vm1324, %v1317, 0.0
    %v1327 = vadd.f32 %v1325, %v1326
    %v1328 = vsel %vm1324, %v1318, 0.0
    %v1329 = vadd.f32 %v1327, %v1328
    %v1330 = vsel %vm1324, %v1319, 0.0
    %v1331 = vadd.f32 %v1329, %v1330
    %v1332 = vrot.slane %v1331, 4
    %v1333 = vadd.f32 %v1331, %v1332
    %v1334 = vrot.slane %v1333, 2
    %v1335 = vadd.f32 %v1333, %v1334
    %v1336 = vrot.slane %v1335, 1
    %v1337 = vadd.f32 %v1335, %v1336
    %v1338 = vsel %vm1324, %v1320, 0.0
    %v1339 = vsel %vm1324, %v1321, 0.0
    %v1340 = vadd.f32 %v1338, %v1339
    %v1341 = vsel %vm1324, %v1322, 0.0
    %v1342 = vadd.f32 %v1340, %v1341
    %v1343 = vsel %vm1324, %v1323, 0.0
    %v1344 = vadd.f32 %v1342, %v1343
    %v1345 = vrot.slane %v1344, 4
    %v1346 = vadd.f32 %v1344, %v1345
    %v1347 = vrot.slane %v1346, 2
    %v1348 = vadd.f32 %v1346, %v1347
    %v1349 = vrot.slane %v1348, 1
    %v1350 = vadd.f32 %v1348, %v1349
    %v1351 = vld [vmem:[%s5] sm:$0x1]
    %v1353 = vlaneseq
    %v1354 = vshrl.u32 %v1353, 7
    %v1355 = vsub.s32 0, %v1354
    %v1356 = vrot.slane %v1351, %v1355
    %v1358 = vadd.f32 %v1337, %v1356
    %v1359 = vadd.f32 %v1350, %v1356
    %v1362 = vrot.slane %v1359, 7
    %vm1363 = vcmask 1041409
    %v1364 = vsel %vm1363, %v1362, %v1358
    %vm1366 = vcmask 9216
    %1367 = vst.msk [vmem:[#allocation2] sm:$0x3] %vm1366, %v1364
    // Predicated region
    $region26: #{compactcnn_forward.1} parent=1 // pred_check
      _
    $region27: #{compactcnn_forward.1} parent=1 // pred_check_branch
      %1369 = sbr.rel (0) target = $region29
    $region28: #{compactcnn_forward.1} parent=1 // pred_region
      %s1371 = ssub.s32 32, 32
      %1372 = vsyncadd [#allocation3], %s1371
      %s1374 = sshll.u32 [#allocation2], 4
      %s1375 = int_to_ptr.vmem [resolvable:$true] %s1374
      %1377 = dma.vmem_to_hbm [thread:$0]  %s1375, 32, %s6, [#allocation3]
    $region29: #{compactcnn_forward.1} parent=1 // pred_fallthru
      _
    // Predicated region
    $region30: #{compactcnn_forward.1} parent=1 // pred_check
      _
    $region31: #{compactcnn_forward.1} parent=1 // pred_check_branch
      %1379 = sbr.rel (0) target = $region33
    $region32: #{compactcnn_forward.1} parent=1 // pred_region
      %1380 = dma.done [#allocation3], 32
    $region33: #{compactcnn_forward.1} parent=1 // pred_fallthru
      _
    %1381 = vsyncpa [#allocation3], 1

</llo_original>
